<compile_context>
chip_gen: v6e
topology: v6e:2x2x1
jax: 0.10.0
libtpu: 0.0.40
codegen_flags: <defaults>
</compile_context>

<pallas_src>
import functools

import jax
import jax.numpy as jnp
from jax.experimental import pallas as pl
from jax.experimental.pallas import tpu as pltpu


def _elem_pow(x, power):
    """x**power using repeated multiplies for small positive integer powers."""
    if isinstance(power, int) or (isinstance(power, float) and power.is_integer()):
        ip = int(power)
        if ip == 1:
            return x
        if ip == 2:
            return x * x
        if ip > 0:
            r = x
            for _ in range(ip - 1):
                r = r * x
            return r
    # Non-integer (or non-positive-integer) exponent: fall back to jnp.power.
    return jnp.power(x, power)


def _dice_kernel(p_ref, t_ref, loss_ref, num_acc, den_acc, *,
                 smooth, power, f_total, tile_f, block_n):
    k = pl.program_id(1)

    @pl.when(k == 0)
    def _():
        num_acc[...] = jnp.zeros_like(num_acc)
        den_acc[...] = jnp.zeros_like(den_acc)

    n_chunks = tile_f // 128
    needs_mask = (f_total % tile_f) != 0  # static: only emit mask code if ragged

    if needs_mask:
        lane = jax.lax.broadcasted_iota(jnp.int32, (block_n, 128), 1)
        tile_base = k * tile_f

    # Per-lane partial sums: pure VPU in the steady state (no XLU, no narrow
    # masked stores per step).
    num_part = jnp.zeros((block_n, 128), jnp.float32)
    den_part = jnp.zeros((block_n, 128), jnp.float32)

    for c in range(n_chunks):  # static, lane-aligned slices of the VMEM tile
        p = p_ref[:, c * 128:(c + 1) * 128].astype(jnp.float32)
        t = t_ref[:, c * 128:(c + 1) * 128].astype(jnp.float32)
        pt = p * t
        dd = _elem_pow(p, power) + _elem_pow(t, power)
        if needs_mask:
            valid = (tile_base + c * 128 + lane) < f_total
            pt = jnp.where(valid, pt, 0.0)
            dd = jnp.where(valid, dd, 0.0)
        num_part = num_part + pt
        den_part = den_part + dd

    num_acc[...] += num_part
    den_acc[...] += den_part

    @pl.when(k == pl.num_programs(1) - 1)
    def _():
        # Single cross-lane (XLU) reduce in the epilogue only.
        num = jnp.sum(num_acc[...], axis=1, keepdims=True) + smooth
        den = jnp.sum(den_acc[...], axis=1, keepdims=True) + smooth
        loss_ref[...] = (1.0 - num / den).astype(loss_ref.dtype)


def dice_loss(predict, target, *, smooth=1.0, p=2, reduction="mean",
              max_tile_f=4096):
    assert predict.shape[0] == target.shape[0], \
        "predict & target batch size don't match"
    n = predict.shape[0]

    # Flatten to (N, F), same as torch .view(N, -1) on contiguous input.
    # Inputs keep their HBM dtype (e.g. bf16); the kernel upcasts to f32.
    pred2d = predict.reshape(n, -1)
    targ2d = target.reshape(n, -1)
    f = pred2d.shape[1]

    # Batch block: fill sublanes (8) when possible; otherwise take full batch.
    # block_n always divides n, so the batch axis is never ragged.
    block_n = 8 if (n % 8 == 0) else n
    grid_n = n // block_n

    # Feature tile: multiple of 128 lanes, as large as max_tile_f but no larger
    # than F rounded up to 128. The ragged tail (if any) is masked in-kernel.
    tile_f = min(int(max_tile_f), pl.cdiv(f, 128) * 128)
    tile_f = max(128, (tile_f // 128) * 128)
    grid_f = pl.cdiv(f, tile_f)

    if (f % tile_f) != 0:
        # Masked tail lanes contribute 0 to num and 0^p + 0^p to den, which is
        # only zero for p > 0.
        assert float(p) > 0, "ragged feature tiling requires p > 0"

    kernel = functools.partial(
        _dice_kernel, smooth=float(smooth), power=p,
        f_total=f, tile_f=tile_f, block_n=block_n)

    per_batch_loss = pl.pallas_call(
        kernel,
        out_shape=jax.ShapeDtypeStruct((n, 1), jnp.float32),
        grid_spec=pltpu.PrefetchScalarGridSpec(
            num_scalar_prefetch=0,
            grid=(grid_n, grid_f),
            in_specs=[
                pl.BlockSpec((block_n, tile_f), lambda i, k: (i, k)),
                pl.BlockSpec((block_n, tile_f), lambda i, k: (i, k)),
            ],
            out_specs=pl.BlockSpec((block_n, 1), lambda i, k: (i, 0)),
            scratch_shapes=[
                pltpu.VMEM((block_n, 128), jnp.float32),  # num lane accumulator
                pltpu.VMEM((block_n, 128), jnp.float32),  # den lane accumulator
            ],
        ),
        compiler_params=pltpu.CompilerParams(
            dimension_semantics=("parallel", "arbitrary")),
    )(pred2d, targ2d)

    per_batch_loss = per_batch_loss[:, 0]  # (N,)

    if reduction == "mean":
        return jnp.mean(per_batch_loss)
    elif reduction == "sum":
        return jnp.sum(per_batch_loss)
    elif reduction == "none":
        return per_batch_loss
    else:
        raise Exception("Unexpected reduction {}".format(reduction))


def _dice_loss_ref(predict, target, smooth=1.0, p=2, reduction="mean"):
    n = predict.shape[0]
    pred2d = predict.reshape(n, -1).astype(jnp.float32)
    targ2d = target.reshape(n, -1).astype(jnp.float32)
    num = jnp.sum(pred2d * targ2d, axis=1) + smooth
    den = jnp.sum(pred2d ** p + targ2d ** p, axis=1) + smooth
    loss = 1.0 - num / den
    if reduction == "mean":
        return jnp.mean(loss)
    elif reduction == "sum":
        return jnp.sum(loss)
    return loss


if __name__ == "__main__":
    key = jax.random.PRNGKey(0)
    k1, k2, k3, k4 = jax.random.split(key, 4)

    # Segmentation-style input: [N, C, H, W]
    N, C, H, W = 2, 4, 16, 16
    predict = jax.nn.sigmoid(
        jax.random.normal(k1, (N, C, H, W), dtype=jnp.float32))
    target = (jax.random.uniform(k2, (N, C, H, W)) > 0.5).astype(jnp.float32)

    loss = dice_loss(predict, target, smooth=1.0, p=2, reduction="mean")
    loss = jax.block_until_ready(loss)
    ref = _dice_loss_ref(predict, target, smooth=1.0, p=2, reduction="mean")
    assert jnp.allclose(loss, ref, atol=1e-5, rtol=1e-5), (loss, ref)

    # Ragged feature count (F = 91, not a multiple of 128) -> exercises the
    # in-kernel lane mask; reduction='none' path.
    predict2 = jax.nn.sigmoid(jax.random.normal(k3, (3, 7, 13), jnp.float32))
    target2 = (jax.random.uniform(k4, (3, 7, 13)) > 0.5).astype(jnp.float32)
    loss2 = dice_loss(predict2, target2, smooth=1.0, p=2, reduction="none")
    loss2 = jax.block_until_ready(loss2)
    ref2 = _dice_loss_ref(predict2, target2, smooth=1.0, p=2, reduction="none")
    assert jnp.allclose(loss2, ref2, atol=1e-5, rtol=1e-5), (loss2, ref2)

    # bf16 inputs stay bf16 in HBM (half the DMA bytes); upcast happens in-kernel.
    loss3 = dice_loss(predict.astype(jnp.bfloat16), target.astype(jnp.bfloat16),
                      smooth=1.0, p=2, reduction="sum")
    loss3 = jax.block_until_ready(loss3)
    ref3 = _dice_loss_ref(predict.astype(jnp.bfloat16),
                          target.astype(jnp.bfloat16),
                          smooth=1.0, p=2, reduction="sum")
    assert jnp.allclose(loss3, ref3, atol=1e-3, rtol=1e-3), (loss3, ref3)

    print("KERNEL_OK")
</pallas_src>

<mosaic_0001>
module attributes {stable_mosaic.version = 11 : i64} {
  func.func @_dice_kernel(%arg0: i32, %arg1: i32, %arg2: memref<2x1024xf32, #tpu.memory_space<vmem>>, %arg3: memref<2x1024xf32, #tpu.memory_space<vmem>>, %arg4: memref<2x1xf32, #tpu.memory_space<vmem>>, %arg5: memref<2x128xf32, #tpu.memory_space<vmem>>, %arg6: memref<2x128xf32, #tpu.memory_space<vmem>>) attributes {dimension_semantics = [#tpu.dimension_semantics<parallel>, #tpu.dimension_semantics<arbitrary>], iteration_bounds = array<i64: 1, 1>, scalar_prefetch = 0 : i64, scratch_operands = 2 : i64, tpu.core_type = #tpu.core_type<tc>, window_params = [{transform_indices = @transform_0, window_bounds = array<i64: 2, 1024>}, {transform_indices = @transform_1, window_bounds = array<i64: 2, 1024>}, {transform_indices = @transform_2, window_bounds = array<i64: 2, 1>}]} {
    %c0_i32 = arith.constant 0 : i32
    %0 = arith.cmpi eq, %arg1, %c0_i32 : i32
    %1 = arith.extui %0 : i1 to i32
    %c0_i32_0 = arith.constant 0 : i32
    %2 = arith.cmpi ne, %1, %c0_i32_0 : i32
    scf.if %2 {
      %cst_36 = arith.constant 0.000000e+00 : f32
      %78 = vector.broadcast %cst_36 : f32 to vector<2x128xf32>
      %c0_37 = arith.constant 0 : index
      %c0_38 = arith.constant 0 : index
      %79 = vector.load %arg5[%c0_37, %c0_38] : memref<2x128xf32, #tpu.memory_space<vmem>>, vector<2x128xf32>
      tpu.vector_store %arg5[%c0_37, %c0_38], %78 {strides = array<i32>} : memref<2x128xf32, #tpu.memory_space<vmem>>, vector<2x128xf32>,
      %cst_39 = arith.constant 0.000000e+00 : f32
      %80 = vector.broadcast %cst_39 : f32 to vector<2x128xf32>
      %c0_40 = arith.constant 0 : index
      %c0_41 = arith.constant 0 : index
      %81 = vector.load %arg6[%c0_40, %c0_41] : memref<2x128xf32, #tpu.memory_space<vmem>>, vector<2x128xf32>
      tpu.vector_store %arg6[%c0_40, %c0_41], %80 {strides = array<i32>} : memref<2x128xf32, #tpu.memory_space<vmem>>, vector<2x128xf32>,
    } else {
    }
    %cst = arith.constant 0.000000e+00 : f32
    %3 = vector.broadcast %cst : f32 to vector<2x128xf32>
    %cst_1 = arith.constant 0.000000e+00 : f32
    %4 = vector.broadcast %cst_1 : f32 to vector<2x128xf32>
    %c0 = arith.constant 0 : index
    %c0_2 = arith.constant 0 : index
    %5 = vector.load %arg2[%c0, %c0_2] : memref<2x1024xf32, #tpu.memory_space<vmem>>, vector<2x128xf32>
    %c0_3 = arith.constant 0 : index
    %c0_4 = arith.constant 0 : index
    %6 = vector.load %arg3[%c0_3, %c0_4] : memref<2x1024xf32, #tpu.memory_space<vmem>>, vector<2x128xf32>
    %7 = arith.mulf %5, %6 : vector<2x128xf32>
    %8 = arith.mulf %5, %5 : vector<2x128xf32>
    %9 = arith.mulf %6, %6 : vector<2x128xf32>
    %10 = arith.addf %8, %9 : vector<2x128xf32>
    %11 = arith.addf %3, %7 : vector<2x128xf32>
    %12 = arith.addf %4, %10 : vector<2x128xf32>
    %c0_5 = arith.constant 0 : index
    %c128 = arith.constant 128 : index
    %13 = vector.load %arg2[%c0_5, %c128] : memref<2x1024xf32, #tpu.memory_space<vmem>>, vector<2x128xf32>
    %c0_6 = arith.constant 0 : index
    %c128_7 = arith.constant 128 : index
    %14 = vector.load %arg3[%c0_6, %c128_7] : memref<2x1024xf32, #tpu.memory_space<vmem>>, vector<2x128xf32>
    %15 = arith.mulf %13, %14 : vector<2x128xf32>
    %16 = arith.mulf %13, %13 : vector<2x128xf32>
    %17 = arith.mulf %14, %14 : vector<2x128xf32>
    %18 = arith.addf %16, %17 : vector<2x128xf32>
    %19 = arith.addf %11, %15 : vector<2x128xf32>
    %20 = arith.addf %12, %18 : vector<2x128xf32>
    %c0_8 = arith.constant 0 : index
    %c256 = arith.constant 256 : index
    %21 = vector.load %arg2[%c0_8, %c256] : memref<2x1024xf32, #tpu.memory_space<vmem>>, vector<2x128xf32>
    %c0_9 = arith.constant 0 : index
    %c256_10 = arith.constant 256 : index
    %22 = vector.load %arg3[%c0_9, %c256_10] : memref<2x1024xf32, #tpu.memory_space<vmem>>, vector<2x128xf32>
    %23 = arith.mulf %21, %22 : vector<2x128xf32>
    %24 = arith.mulf %21, %21 : vector<2x128xf32>
    %25 = arith.mulf %22, %22 : vector<2x128xf32>
    %26 = arith.addf %24, %25 : vector<2x128xf32>
    %27 = arith.addf %19, %23 : vector<2x128xf32>
    %28 = arith.addf %20, %26 : vector<2x128xf32>
    %c0_11 = arith.constant 0 : index
    %c384 = arith.constant 384 : index
    %29 = vector.load %arg2[%c0_11, %c384] : memref<2x1024xf32, #tpu.memory_space<vmem>>, vector<2x128xf32>
    %c0_12 = arith.constant 0 : index
    %c384_13 = arith.constant 384 : index
    %30 = vector.load %arg3[%c0_12, %c384_13] : memref<2x1024xf32, #tpu.memory_space<vmem>>, vector<2x128xf32>
    %31 = arith.mulf %29, %30 : vector<2x128xf32>
    %32 = arith.mulf %29, %29 : vector<2x128xf32>
    %33 = arith.mulf %30, %30 : vector<2x128xf32>
    %34 = arith.addf %32, %33 : vector<2x128xf32>
    %35 = arith.addf %27, %31 : vector<2x128xf32>
    %36 = arith.addf %28, %34 : vector<2x128xf32>
    %c0_14 = arith.constant 0 : index
    %c512 = arith.constant 512 : index
    %37 = vector.load %arg2[%c0_14, %c512] : memref<2x1024xf32, #tpu.memory_space<vmem>>, vector<2x128xf32>
    %c0_15 = arith.constant 0 : index
    %c512_16 = arith.constant 512 : index
    %38 = vector.load %arg3[%c0_15, %c512_16] : memref<2x1024xf32, #tpu.memory_space<vmem>>, vector<2x128xf32>
    %39 = arith.mulf %37, %38 : vector<2x128xf32>
    %40 = arith.mulf %37, %37 : vector<2x128xf32>
    %41 = arith.mulf %38, %38 : vector<2x128xf32>
    %42 = arith.addf %40, %41 : vector<2x128xf32>
    %43 = arith.addf %35, %39 : vector<2x128xf32>
    %44 = arith.addf %36, %42 : vector<2x128xf32>
    %c0_17 = arith.constant 0 : index
    %c640 = arith.constant 640 : index
    %45 = vector.load %arg2[%c0_17, %c640] : memref<2x1024xf32, #tpu.memory_space<vmem>>, vector<2x128xf32>
    %c0_18 = arith.constant 0 : index
    %c640_19 = arith.constant 640 : index
    %46 = vector.load %arg3[%c0_18, %c640_19] : memref<2x1024xf32, #tpu.memory_space<vmem>>, vector<2x128xf32>
    %47 = arith.mulf %45, %46 : vector<2x128xf32>
    %48 = arith.mulf %45, %45 : vector<2x128xf32>
    %49 = arith.mulf %46, %46 : vector<2x128xf32>
    %50 = arith.addf %48, %49 : vector<2x128xf32>
    %51 = arith.addf %43, %47 : vector<2x128xf32>
    %52 = arith.addf %44, %50 : vector<2x128xf32>
    %c0_20 = arith.constant 0 : index
    %c768 = arith.constant 768 : index
    %53 = vector.load %arg2[%c0_20, %c768] : memref<2x1024xf32, #tpu.memory_space<vmem>>, vector<2x128xf32>
    %c0_21 = arith.constant 0 : index
    %c768_22 = arith.constant 768 : index
    %54 = vector.load %arg3[%c0_21, %c768_22] : memref<2x1024xf32, #tpu.memory_space<vmem>>, vector<2x128xf32>
    %55 = arith.mulf %53, %54 : vector<2x128xf32>
    %56 = arith.mulf %53, %53 : vector<2x128xf32>
    %57 = arith.mulf %54, %54 : vector<2x128xf32>
    %58 = arith.addf %56, %57 : vector<2x128xf32>
    %59 = arith.addf %51, %55 : vector<2x128xf32>
    %60 = arith.addf %52, %58 : vector<2x128xf32>
    %c0_23 = arith.constant 0 : index
    %c896 = arith.constant 896 : index
    %61 = vector.load %arg2[%c0_23, %c896] : memref<2x1024xf32, #tpu.memory_space<vmem>>, vector<2x128xf32>
    %c0_24 = arith.constant 0 : index
    %c896_25 = arith.constant 896 : index
    %62 = vector.load %arg3[%c0_24, %c896_25] : memref<2x1024xf32, #tpu.memory_space<vmem>>, vector<2x128xf32>
    %63 = arith.mulf %61, %62 : vector<2x128xf32>
    %64 = arith.mulf %61, %61 : vector<2x128xf32>
    %65 = arith.mulf %62, %62 : vector<2x128xf32>
    %66 = arith.addf %64, %65 : vector<2x128xf32>
    %67 = arith.addf %59, %63 : vector<2x128xf32>
    %68 = arith.addf %60, %66 : vector<2x128xf32>
    %c0_26 = arith.constant 0 : index
    %c0_27 = arith.constant 0 : index
    %69 = vector.load %arg5[%c0_26, %c0_27] : memref<2x128xf32, #tpu.memory_space<vmem>>, vector<2x128xf32>
    %70 = arith.addf %69, %67 : vector<2x128xf32>
    %c0_28 = arith.constant 0 : index
    %c0_29 = arith.constant 0 : index
    %71 = vector.load %arg5[%c0_28, %c0_29] : memref<2x128xf32, #tpu.memory_space<vmem>>, vector<2x128xf32>
    tpu.vector_store %arg5[%c0_28, %c0_29], %70 {strides = array<i32>} : memref<2x128xf32, #tpu.memory_space<vmem>>, vector<2x128xf32>,
    %c0_30 = arith.constant 0 : index
    %c0_31 = arith.constant 0 : index
    %72 = vector.load %arg6[%c0_30, %c0_31] : memref<2x128xf32, #tpu.memory_space<vmem>>, vector<2x128xf32>
    %73 = arith.addf %72, %68 : vector<2x128xf32>
    %c0_32 = arith.constant 0 : index
    %c0_33 = arith.constant 0 : index
    %74 = vector.load %arg6[%c0_32, %c0_33] : memref<2x128xf32, #tpu.memory_space<vmem>>, vector<2x128xf32>
    tpu.vector_store %arg6[%c0_32, %c0_33], %73 {strides = array<i32>} : memref<2x128xf32, #tpu.memory_space<vmem>>, vector<2x128xf32>,
    %c0_i32_34 = arith.constant 0 : i32
    %75 = arith.cmpi eq, %arg1, %c0_i32_34 : i32
    %76 = arith.extui %75 : i1 to i32
    %c0_i32_35 = arith.constant 0 : i32
    %77 = arith.cmpi ne, %76, %c0_i32_35 : i32
    scf.if %77 {
      %c0_36 = arith.constant 0 : index
      %c0_37 = arith.constant 0 : index
      %78 = vector.load %arg5[%c0_36, %c0_37] : memref<2x128xf32, #tpu.memory_space<vmem>>, vector<2x128xf32>
      %cst_38 = arith.constant dense<0.000000e+00> : vector<2xf32>
      %79 = vector.multi_reduction <add>, %78, %cst_38 [1] : vector<2x128xf32> to vector<2xf32>
      %80 = vector.shape_cast %79 : vector<2xf32> to vector<2x1xf32>
      %cst_39 = arith.constant 1.000000e+00 : f32
      %81 = vector.broadcast %cst_39 : f32 to vector<2x1xf32>
      %82 = arith.addf %80, %81 : vector<2x1xf32>
      %c0_40 = arith.constant 0 : index
      %c0_41 = arith.constant 0 : index
      %83 = vector.load %arg6[%c0_40, %c0_41] : memref<2x128xf32, #tpu.memory_space<vmem>>, vector<2x128xf32>
      %cst_42 = arith.constant dense<0.000000e+00> : vector<2xf32>
      %84 = vector.multi_reduction <add>, %83, %cst_42 [1] : vector<2x128xf32> to vector<2xf32>
      %85 = vector.shape_cast %84 : vector<2xf32> to vector<2x1xf32>
      %cst_43 = arith.constant 1.000000e+00 : f32
      %86 = vector.broadcast %cst_43 : f32 to vector<2x1xf32>
      %87 = arith.addf %85, %86 : vector<2x1xf32>
      %88 = arith.divf %82, %87 : vector<2x1xf32>
      %cst_44 = arith.constant 1.000000e+00 : f32
      %89 = vector.broadcast %cst_44 : f32 to vector<2x1xf32>
      %90 = arith.subf %89, %88 : vector<2x1xf32>
      %c0_45 = arith.constant 0 : index
      %c0_46 = arith.constant 0 : index
      %91 = vector.load %arg4[%c0_45, %c0_46] : memref<2x1xf32, #tpu.memory_space<vmem>>, vector<2x1xf32>
      tpu.vector_store %arg4[%c0_45, %c0_46], %90 {strides = array<i32>} : memref<2x1xf32, #tpu.memory_space<vmem>>, vector<2x1xf32>,
    } else {
    }
    return
  }
  func.func @transform_0(%arg0: i32, %arg1: i32) -> (i32, i32) {
    %c0_i32 = arith.constant 0 : i32
    return %arg0, %arg1 : i32, i32
  }
  func.func @transform_1(%arg0: i32, %arg1: i32) -> (i32, i32) {
    %c0_i32 = arith.constant 0 : i32
    return %arg0, %arg1 : i32, i32
  }
  func.func @transform_2(%arg0: i32, %arg1: i32) -> (i32, i32) {
    %c0_i32 = arith.constant 0 : i32
    %c0_i32_0 = arith.constant 0 : i32
    return %arg0, %c0_i32 : i32, i32
  }
}

</mosaic_0001>

<llo_original>
// kernel: tpu_custom_call.1
$region0: #{tpu_custom_call.1}
  #allocation0 [shape = 'u32[]', space=smem, size = 0x4, offset = 0x4, fixed_abs, tag = 'smem constant byte address 0x4 - core index']
  #allocation1 [shape = 'u32[144,128]{1,0:T(1,128)}', space=vmem, size = 0x12000, scoped, tag = 'internal scratch']
  #allocation2 [shape = 'f32[2,128]{1,0:T(2,128)}', space=vmem, size = 0x400, scoped, tag = 'scratch operand']
  #allocation3 [shape = 'f32[2,128]{1,0:T(2,128)}', space=vmem, size = 0x400, scoped, tag = 'scratch operand']
  %s0 = inlined_call_operand.hbm [shape: f32[2,1024], index: 0, kind: input, shape index: {}]
  %s1 = inlined_call_operand.hbm [shape: f32[2,1024], index: 1, kind: input, shape index: {}]
  %s2 = inlined_call_operand.vmem [shape: f32[2,1], index: 2, kind: output, shape index: {}]
  %s3 = sld [smem:[#allocation0]]
  $region34: #{tpu_custom_call.1} parent=0
    _
  %s5 = ssub.s32 1, %s3
  %s6 = scalar_select 0, %s5, %s3
  $region1: #{tpu_custom_call.1} parent=0
    #allocation4 [shape = 'u8[8192]{0}', space=vmem, size = 0x2000, scoped, tag = 'input window, operand 0, single buffered']
    #allocation5 [shape = 's32[1]{0}', space=sflag, size = 0x4, scoped, tag = 'scoped memory for tpu_custom_call.1']
    #allocation6 [shape = 'u8[8192]{0}', space=vmem, size = 0x2000, scoped, tag = 'input window, operand 1, single buffered']
    #allocation7 [shape = 's32[1]{0}', space=sflag, size = 0x4, scoped, tag = 'scoped memory for tpu_custom_call.1']
    %7 = vsyncpa [#allocation5], 0
    %8 = vsyncpa [#allocation7], 0
    // Predicated region
    $region2: #{tpu_custom_call.1} parent=1 // pred_check
      _
    $region3: #{tpu_custom_call.1} parent=1 // pred_check_branch
      %10 = sbr.rel (0) target = $region5
    $region4: #{tpu_custom_call.1} parent=1 // pred_region
      %s12 = ssub.s32 256, 256
      %13 = vsyncadd [#allocation5], %s12
      %s15 = sshll.u32 [#allocation4], 4
      %s16 = int_to_ptr.vmem [resolvable:$true] %s15
      %18 = dma.hbm_to_vmem [thread:$0]  %s0, 256, %s16, [#allocation5]
    $region5: #{tpu_custom_call.1} parent=1 // pred_fallthru
      _
    // Predicated region
    $region6: #{tpu_custom_call.1} parent=1 // pred_check
      _
    $region7: #{tpu_custom_call.1} parent=1 // pred_check_branch
      %20 = sbr.rel (0) target = $region9
    $region8: #{tpu_custom_call.1} parent=1 // pred_region
      %s22 = ssub.s32 256, 256
      %23 = vsyncadd [#allocation7], %s22
      %s25 = sshll.u32 [#allocation6], 4
      %s26 = int_to_ptr.vmem [resolvable:$true] %s25
      %28 = dma.hbm_to_vmem [thread:$0]  %s1, 256, %s26, [#allocation7]
    $region9: #{tpu_custom_call.1} parent=1 // pred_fallthru
      _
    // Predicated region
    $region10: #{tpu_custom_call.1} parent=1 // pred_check
      _
    $region11: #{tpu_custom_call.1} parent=1 // pred_check_branch
      %30 = sbr.rel (0) target = $region13
    $region12: #{tpu_custom_call.1} parent=1 // pred_region
      %31 = dma.done [#allocation5], 256
    $region13: #{tpu_custom_call.1} parent=1 // pred_fallthru
      _
    // Predicated region
    $region14: #{tpu_custom_call.1} parent=1 // pred_check
      _
    $region15: #{tpu_custom_call.1} parent=1 // pred_check_branch
      %33 = sbr.rel (0) target = $region17
    $region16: #{tpu_custom_call.1} parent=1 // pred_region
      %34 = dma.done [#allocation7], 256
    $region17: #{tpu_custom_call.1} parent=1 // pred_fallthru
      _
    %p35 = scmp.eq.s32.totalorder 0, 0
    // Predicated region
    $region18: #{tpu_custom_call.1} parent=1 // pred_check
      %p36 = pneg %p35
    $region19: #{tpu_custom_call.1} parent=1 // pred_check_branch
      %38 = sbr.rel (%p36) target = $region21
    $region20: #{tpu_custom_call.1} parent=1 // pred_region
      %39 = vst [vmem:[#allocation2] sm:$0x3] 0.0
      %40 = vst [vmem:[#allocation3] sm:$0x3] 0.0
    $region21: #{tpu_custom_call.1} parent=1 // pred_fallthru
      _
    %v41 = vld [vmem:[#allocation4] sm:$0x3]
    %v42 = vld [vmem:[#allocation6] sm:$0x3]
    %v43 = vmul.f32 %v41, %v42
    %v44 = vmul.f32 %v41, %v41
    %v45 = vmul.f32 %v42, %v42
    %v46 = vadd.f32 %v44, %v45
    %v47 = vadd.f32 %v43, 0.0
    %v48 = vadd.f32 %v46, 0.0
    %v49 = vld [vmem:[#allocation4 + $0x2] sm:$0x3]
    %v50 = vld [vmem:[#allocation6 + $0x2] sm:$0x3]
    %v51 = vmul.f32 %v49, %v50
    %v52 = vmul.f32 %v49, %v49
    %v53 = vmul.f32 %v50, %v50
    %v54 = vadd.f32 %v52, %v53
    %v55 = vadd.f32 %v47, %v51
    %v56 = vadd.f32 %v48, %v54
    %v57 = vld [vmem:[#allocation4 + $0x4] sm:$0x3]
    %v58 = vld [vmem:[#allocation6 + $0x4] sm:$0x3]
    %v59 = vmul.f32 %v57, %v58
    %v60 = vmul.f32 %v57, %v57
    %v61 = vmul.f32 %v58, %v58
    %v62 = vadd.f32 %v60, %v61
    %v63 = vadd.f32 %v55, %v59
    %v64 = vadd.f32 %v56, %v62
    %v65 = vld [vmem:[#allocation4 + $0x6] sm:$0x3]
    %v66 = vld [vmem:[#allocation6 + $0x6] sm:$0x3]
    %v67 = vmul.f32 %v65, %v66
    %v68 = vmul.f32 %v65, %v65
    %v69 = vmul.f32 %v66, %v66
    %v70 = vadd.f32 %v68, %v69
    %v71 = vadd.f32 %v63, %v67
    %v72 = vadd.f32 %v64, %v70
    %v73 = vld [vmem:[#allocation4 + $0x8] sm:$0x3]
    %v74 = vld [vmem:[#allocation6 + $0x8] sm:$0x3]
    %v75 = vmul.f32 %v73, %v74
    %v76 = vmul.f32 %v73, %v73
    %v77 = vmul.f32 %v74, %v74
    %v78 = vadd.f32 %v76, %v77
    %v79 = vadd.f32 %v71, %v75
    %v80 = vadd.f32 %v72, %v78
    %v81 = vld [vmem:[#allocation4 + $0xa] sm:$0x3]
    %v82 = vld [vmem:[#allocation6 + $0xa] sm:$0x3]
    %v83 = vmul.f32 %v81, %v82
    %v84 = vmul.f32 %v81, %v81
    %v85 = vmul.f32 %v82, %v82
    %v86 = vadd.f32 %v84, %v85
    %v87 = vadd.f32 %v79, %v83
    %v88 = vadd.f32 %v80, %v86
    %v89 = vld [vmem:[#allocation4 + $0xc] sm:$0x3]
    %v90 = vld [vmem:[#allocation6 + $0xc] sm:$0x3]
    %v91 = vmul.f32 %v89, %v90
    %v92 = vmul.f32 %v89, %v89
    %v93 = vmul.f32 %v90, %v90
    %v94 = vadd.f32 %v92, %v93
    %v95 = vadd.f32 %v87, %v91
    %v96 = vadd.f32 %v88, %v94
    %v97 = vld [vmem:[#allocation4 + $0xe] sm:$0x3]
    %v98 = vld [vmem:[#allocation6 + $0xe] sm:$0x3]
    %v99 = vmul.f32 %v97, %v98
    %v100 = vmul.f32 %v97, %v97
    %v101 = vmul.f32 %v98, %v98
    %v102 = vadd.f32 %v100, %v101
    %v103 = vadd.f32 %v95, %v99
    %v104 = vadd.f32 %v96, %v102
    %v105 = vld [vmem:[#allocation2] sm:$0x3]
    %v106 = vadd.f32 %v105, %v103
    %107 = vst [vmem:[#allocation2] sm:$0x3] %v106
    %v108 = vld [vmem:[#allocation3] sm:$0x3]
    %v109 = vadd.f32 %v108, %v104
    %110 = vst [vmem:[#allocation3] sm:$0x3] %v109
    // Predicated region
    $region22: #{tpu_custom_call.1} parent=1 // pred_check
      %p111 = pneg %p35
    $region23: #{tpu_custom_call.1} parent=1 // pred_check_branch
      %113 = sbr.rel (%p111) target = $region25
    $region24: #{tpu_custom_call.1} parent=1 // pred_region
      %v114 = vld [vmem:[#allocation2] sm:$0x3]
      %vm115 = vcmask 1041408
      %v116 = vsel %vm115, %v114, 0.0
      %117 = vadd.xlane.f32.xlu0 %v116
      %v118 = vpop.xlane.xlu0 %117
      %v119 = vadd.f32 %v118, 1.0
      %v120 = vld [vmem:[#allocation3] sm:$0x3]
      %v121 = vsel %vm115, %v120, 0.0
      %122 = vadd.xlane.f32.xlu0 %v121
      %v123 = vpop.xlane.xlu0 %122
      %v124 = vadd.f32 %v123, 1.0
      %v125 = vrcp.pop %v124
      %v126 = vmul.f32 %v119, %v125
      %v127 = vsub.f32 1.0, %v126
      %vm128 = vcmask 1024
      %129 = vst.msk [vmem:[%s2] sm:$0x3] %vm128, %v127
    $region25: #{tpu_custom_call.1} parent=1 // pred_fallthru
      _
    // Predicated region
    $region26: #{tpu_custom_call.1} parent=1 // pred_check
      _
    $region27: #{tpu_custom_call.1} parent=1 // pred_check_branch
      %131 = sbr.rel (0) target = $region29
    $region28: #{tpu_custom_call.1} parent=1 // pred_region
      _
    $region29: #{tpu_custom_call.1} parent=1 // pred_fallthru
      _
    // Predicated region
    $region30: #{tpu_custom_call.1} parent=1 // pred_check
      _
    $region31: #{tpu_custom_call.1} parent=1 // pred_check_branch
      %133 = sbr.rel (0) target = $region33
    $region32: #{tpu_custom_call.1} parent=1 // pred_region
      _
    $region33: #{tpu_custom_call.1} parent=1 // pred_fallthru
      _
    %134 = vsyncpa [#allocation5], 1
    %135 = vsyncpa [#allocation7], 1

</llo_original>
